<compile_context>
chip_gen: v7x
topology: tpu7x:2x2x1
jax: 0.10.0
libtpu: 0.0.40
codegen_flags: <defaults>
</compile_context>

<pallas_src>
import jax
import jax.numpy as jnp
from jax.experimental import pallas as pl
from jax.experimental.pallas import tpu as pltpu


def _block_c_kernel(x_ref, w2_ref, b2_ref, o_ref):
    # x_ref : (1, TM, C) with TM = TH*W          (TH*W input pixels, channels-last)
    # w2_ref: (C, 2*Cout)  width-duplicated 1x1 weight [w | w]   (resident)
    # b2_ref: (1, 2*Cout)  width-duplicated bias       [b | b]   (resident)
    # o_ref : (1, TH, 2, W, 2*Cout) free view of the (2*TH, 2*W, Cout) NHWC output
    _, th, _, w_pix, two_cout = o_ref.shape

    x = x_ref[0]                                                   # (TM, C)
    y = jnp.dot(x, w2_ref[...], preferred_element_type=jnp.float32)
    y = (y + b2_ref[...]).astype(o_ref.dtype)                      # (TM, 2*Cout)
    # Split rows back into (TH, W); lane dim unchanged -> free when W % 8 == 0.
    y = y.reshape(th, w_pix, two_cout)                             # (TH, W, 2*Cout)

    # Nearest-neighbor x2: width duplicate already in the lane dim (dw major),
    # height duplicate = two full lane-dense stores.
    o_ref[0, :, 0] = y        # output rows 2h   (dh = 0)
    o_ref[0, :, 1] = y        # output rows 2h+1 (dh = 1)


def _pick_row_tile(H, W, C, Cout, itemsize, *, target_rows=1024,
                   vmem_budget_bytes=12 * 1024 * 1024):
    """Largest TH dividing H with TH*W <= target_rows whose double-buffered
    in+out blocks fit the VMEM budget.  TH*W must be a multiple of 8 (sublane
    rule on the (TM, C) block) unless it equals the full H*W extent."""
    valid = []
    for th in range(1, H + 1):
        if H % th:
            continue
        tm = th * W
        if tm % 8 != 0 and tm != H * W:
            continue
        blk = (tm * C + th * 2 * W * 2 * Cout + C * 2 * Cout + 2 * Cout) * itemsize
        if 2 * blk > vmem_budget_bytes:        # double-buffered by the pipeline
            continue
        valid.append(th)
    if not valid:
        raise ValueError(f"no valid row tile for H={H}, W={W}, C={C}")
    under = [th for th in valid if th * W <= target_rows]
    return max(under) if under else min(valid)


def block_c_forward_nhwc(x_nhwc, weight, bias):
    """Channels-last Block_C forward (recommended integration, zero transposes).
    x_nhwc: (N, H, W, C); weight: (Cout, C) or (Cout, C, 1, 1); bias: (Cout,).
    Returns (N, 2H, 2W, Cout) NHWC."""
    if weight.ndim == 4:                       # PyTorch Conv2d 1x1 weight
        weight = weight.reshape(weight.shape[0], weight.shape[1])
    N, H, W, C = x_nhwc.shape
    Cout = weight.shape[0]
    assert Cout == C // 2 and weight.shape[1] == C

    itemsize = jnp.dtype(x_nhwc.dtype).itemsize
    TH = _pick_row_tile(H, W, C, Cout, itemsize)
    TM = TH * W

    x3 = x_nhwc.reshape(N, H * W, C)                       # free view
    w_mat = jnp.transpose(weight, (1, 0)).astype(x_nhwc.dtype)   # (C, Cout), tiny
    w2 = jnp.concatenate([w_mat, w_mat], axis=1)           # (C, 2*Cout)
    b_row = bias.reshape(1, Cout).astype(jnp.float32)
    b2 = jnp.concatenate([b_row, b_row], axis=1)           # (1, 2*Cout)

    flops = 2 * N * H * W * C * (2 * Cout)
    bytes_accessed = (x3.size + w2.size + b2.size
                      + N * 2 * H * 2 * W * Cout) * itemsize

    out5 = pl.pallas_call(
        _block_c_kernel,
        out_shape=jax.ShapeDtypeStruct((N, H, 2, W, 2 * Cout), x_nhwc.dtype),
        grid_spec=pl.GridSpec(
            grid=(N, H // TH),
            in_specs=[
                pl.BlockSpec((1, TM, C), lambda n, t: (n, t, 0)),
                pl.BlockSpec((C, 2 * Cout), lambda n, t: (0, 0)),
                pl.BlockSpec((1, 2 * Cout), lambda n, t: (0, 0)),
            ],
            out_specs=pl.BlockSpec((1, TH, 2, W, 2 * Cout),
                                   lambda n, t: (n, t, 0, 0, 0)),
        ),
        compiler_params=pltpu.CompilerParams(
            dimension_semantics=("parallel", "parallel"),
            vmem_limit_bytes=32 * 1024 * 1024,
        ),
        cost_estimate=pl.CostEstimate(
            flops=flops, transcendentals=0, bytes_accessed=bytes_accessed),
    )(x3, w2, b2)

    # (N, H, 2, W, 2*Cout) -> (N, 2H, 2W, Cout): free row-major view.
    return out5.reshape(N, 2 * H, 2 * W, Cout)


def block_c_forward(x_nchw, weight, bias):
    """PyTorch-parity entry point: NCHW in / NCHW out.
    Prefer block_c_forward_nhwc in a channels-last graph: the two transposes
    here are full extra HBM passes over an already memory-bound op."""
    x_nhwc = jnp.transpose(x_nchw, (0, 2, 3, 1))
    out_nhwc = block_c_forward_nhwc(x_nhwc, weight, bias)
    return jnp.transpose(out_nhwc, (0, 3, 1, 2))


def _reference(x_nchw, weight, bias):
    # pure-JAX reference of the PyTorch module
    y = jnp.einsum("nchw,oc->nohw", x_nchw, weight) + bias[None, :, None, None]
    return jnp.repeat(jnp.repeat(y, 2, axis=2), 2, axis=3)   # nearest upsample x2


if __name__ == "__main__":
    key = jax.random.PRNGKey(0)
    k_x, k_w, k_b = jax.random.split(key, 3)

    N, C, H, W = 2, 4, 16, 16
    Cout = C // 2

    x = jax.random.normal(k_x, (N, C, H, W), dtype=jnp.float32)
    # Conv2d weight is (Cout, Cin, 1, 1) -> squeeze to (Cout, Cin)
    weight = jax.random.normal(k_w, (Cout, C), dtype=jnp.float32) * 0.1
    bias = jax.random.normal(k_b, (Cout,), dtype=jnp.float32) * 0.1

    out = jax.block_until_ready(block_c_forward(x, weight, bias))
    ref = _reference(x, weight, bias)
    assert out.shape == (N, Cout, 2 * H, 2 * W), out.shape
    assert jnp.allclose(out, ref, atol=1e-5, rtol=1e-5), "NCHW path mismatch"

    # Channels-last fast path (no transposes) — recommended integration.
    out_nhwc = jax.block_until_ready(
        block_c_forward_nhwc(jnp.transpose(x, (0, 2, 3, 1)), weight, bias))
    assert jnp.allclose(out_nhwc, jnp.transpose(ref, (0, 2, 3, 1)),
                        atol=1e-5, rtol=1e-5), "NHWC path mismatch"

    print("KERNEL_OK")
</pallas_src>

<mosaic_0001>
module attributes {stable_mosaic.version = 11 : i64} {
  func.func @_block_c_kernel(%arg0: i32, %arg1: i32, %arg2: memref<1x256x4xf32, #tpu.memory_space<vmem>>, %arg3: memref<4x4xf32, #tpu.memory_space<vmem>>, %arg4: memref<1x4xf32, #tpu.memory_space<vmem>>, %arg5: memref<1x16x2x16x4xf32, #tpu.memory_space<vmem>>) attributes {dimension_semantics = [#tpu.dimension_semantics<parallel>, #tpu.dimension_semantics<parallel>], iteration_bounds = array<i64: 2, 1>, scalar_prefetch = 0 : i64, scratch_operands = 0 : i64, tpu.core_type = #tpu.core_type<tc>, window_params = [{transform_indices = @transform_0, window_bounds = array<i64: 1, 256, 4>}, {pipeline_mode = #tpu.pipeline_mode<synchronous>, transform_indices = @transform_1, window_bounds = array<i64: 4, 4>}, {pipeline_mode = #tpu.pipeline_mode<synchronous>, transform_indices = @transform_2, window_bounds = array<i64: 1, 4>}, {transform_indices = @transform_3, window_bounds = array<i64: 1, 16, 2, 16, 4>}]} {
    %c0 = arith.constant 0 : index
    %c0_0 = arith.constant 0 : index
    %c0_1 = arith.constant 0 : index
    %0 = vector.load %arg2[%c0, %c0_0, %c0_1] : memref<1x256x4xf32, #tpu.memory_space<vmem>>, vector<1x256x4xf32>
    %1 = vector.shape_cast %0 : vector<1x256x4xf32> to vector<256x4xf32>
    %c0_2 = arith.constant 0 : index
    %c0_3 = arith.constant 0 : index
    %2 = vector.load %arg3[%c0_2, %c0_3] : memref<4x4xf32, #tpu.memory_space<vmem>>, vector<4x4xf32>
    %cst = arith.constant dense<0.000000e+00> : vector<256x4xf32>
    %3 = tpu.matmul %1, %2, %cst {dimension_numbers = #tpu.dot_dimension_numbers<[1], [0], [0], [1], [0, 0, 1, 1], [], []>} : vector<256x4xf32>, vector<4x4xf32>, vector<256x4xf32> -> vector<256x4xf32>
    %c0_4 = arith.constant 0 : index
    %c0_5 = arith.constant 0 : index
    %4 = vector.load %arg4[%c0_4, %c0_5] : memref<1x4xf32, #tpu.memory_space<vmem>>, vector<1x4xf32>
    %5 = vector.broadcast %4 : vector<1x4xf32> to vector<256x4xf32>
    %6 = arith.addf %3, %5 : vector<256x4xf32>
    %7 = vector.shape_cast %6 : vector<256x4xf32> to vector<16x16x4xf32>
    %c0_6 = arith.constant 0 : index
    %c0_7 = arith.constant 0 : index
    %c0_8 = arith.constant 0 : index
    %c0_9 = arith.constant 0 : index
    %c0_10 = arith.constant 0 : index
    %8 = vector.load %arg5[%c0_6, %c0_7, %c0_8, %c0_9, %c0_10] : memref<1x16x2x16x4xf32, #tpu.memory_space<vmem>>, vector<1x16x1x16x4xf32>
    %9 = vector.shape_cast %8 : vector<1x16x1x16x4xf32> to vector<16x16x4xf32>
    %10 = vector.shape_cast %7 : vector<16x16x4xf32> to vector<1x16x1x16x4xf32>
    tpu.vector_store %arg5[%c0_6, %c0_7, %c0_8, %c0_9, %c0_10], %10 {strides = array<i32>} : memref<1x16x2x16x4xf32, #tpu.memory_space<vmem>>, vector<1x16x1x16x4xf32>,
    %c0_11 = arith.constant 0 : index
    %c0_12 = arith.constant 0 : index
    %c1 = arith.constant 1 : index
    %c0_13 = arith.constant 0 : index
    %c0_14 = arith.constant 0 : index
    %11 = vector.load %arg5[%c0_11, %c0_12, %c1, %c0_13, %c0_14] : memref<1x16x2x16x4xf32, #tpu.memory_space<vmem>>, vector<1x16x1x16x4xf32>
    %12 = vector.shape_cast %11 : vector<1x16x1x16x4xf32> to vector<16x16x4xf32>
    %13 = vector.shape_cast %7 : vector<16x16x4xf32> to vector<1x16x1x16x4xf32>
    tpu.vector_store %arg5[%c0_11, %c0_12, %c1, %c0_13, %c0_14], %13 {strides = array<i32>} : memref<1x16x2x16x4xf32, #tpu.memory_space<vmem>>, vector<1x16x1x16x4xf32>,
    return
  }
  func.func @transform_0(%arg0: i32, %arg1: i32) -> (i32, i32, i32) {
    %c0_i32 = arith.constant 0 : i32
    %c0_i32_0 = arith.constant 0 : i32
    return %arg0, %arg1, %c0_i32 : i32, i32, i32
  }
  func.func @transform_1(%arg0: i32, %arg1: i32) -> (i32, i32) {
    %c0_i32 = arith.constant 0 : i32
    %c0_i32_0 = arith.constant 0 : i32
    %c0_i32_1 = arith.constant 0 : i32
    return %c0_i32, %c0_i32_0 : i32, i32
  }
  func.func @transform_2(%arg0: i32, %arg1: i32) -> (i32, i32) {
    %c0_i32 = arith.constant 0 : i32
    %c0_i32_0 = arith.constant 0 : i32
    %c0_i32_1 = arith.constant 0 : i32
    return %c0_i32, %c0_i32_0 : i32, i32
  }
  func.func @transform_3(%arg0: i32, %arg1: i32) -> (i32, i32, i32, i32, i32) {
    %c0_i32 = arith.constant 0 : i32
    %c0_i32_0 = arith.constant 0 : i32
    %c0_i32_1 = arith.constant 0 : i32
    %c0_i32_2 = arith.constant 0 : i32
    return %arg0, %arg1, %c0_i32, %c0_i32_0, %c0_i32_1 : i32, i32, i32, i32, i32
  }
}

</mosaic_0001>

<llo_original>
// kernel: tpu_custom_call.1
$region0: #{tpu_custom_call.1}
  #allocation0 [shape = 'u32[]', space=smem, size = 0x4, offset = 0x4, fixed_abs, tag = 'smem constant byte address 0x4 - core index']
  #allocation1 [shape = 'u32[144,128]{1,0:T(1,128)}', space=vmem, size = 0x12000, scoped, tag = 'internal scratch']
  %s0 = inlined_call_operand.vmem [shape: f32[2,256,4], index: 0, kind: input, shape index: {}]
  %s1 = inlined_call_operand.vmem [shape: f32[4,4], index: 1, kind: input, shape index: {}]
  %s2 = inlined_call_operand.vmem [shape: f32[1,4], index: 2, kind: input, shape index: {}]
  %s3 = inlined_call_operand.vmem [shape: f32[2,16,2,16,4], index: 3, kind: output, shape index: {}]
  %s4 = sld [smem:[#allocation0]]
  $region45: #{tpu_custom_call.1} parent=0
    _
  %s6 = ssub.s32 1, %s4
  %s7 = scalar_select 0, %s6, %s4
  loop: start=0, step=1, limit=4
  $region2: #{tpu_custom_call.1} parent=0 // loop_pre_header
    _
  $region3: #{tpu_custom_call.1} parent=0 // loop_header
    %s9 = sphi 0, %s13
    %p10 = scmp.ge.s32.totalorder %s9, 4
    %s16 = sphi 0, %s28
    %s17 = sphi 0, %s24
    %s18 = sphi 0, %s16
    %s19 = sphi 0, %s17
    %s20 = sphi 0, %s18
    %s21 = sphi 0, %s19
    %s33 = sphi 0, %s35
    %s36 = sphi 0, %s33
    %s37 = sphi 0, %s36
    %s53 = sphi 0, %s37
    %s57 = sphi 0, %s57
    %s59 = sphi 0, %s57
    %s60 = sphi 0, %s59
    %s74 = sphi 0, %s60
    %s78 = sphi 0, %s78
    %s80 = sphi 0, %s78
    %s81 = sphi 0, %s80
    %s95 = sphi 0, %s81
    %s103 = sphi 0, %s105
    %s106 = sphi 0, %s103
    %s107 = sphi 0, %s106
    %s123 = sphi 0, %s107
  $region4: #{tpu_custom_call.1} parent=0 // loop_header_branch
    %12 = sbr.rel (%p10) target = $region8
  $region5: #{tpu_custom_call.1} parent=0 // loop_body
    %s14 = ssub.s32 %s9, 1
    %s15 = ssub.s32 %s9, 2
    %s22 = sadd.s32 1, %s17
    %p23 = scmp.ge.s32.totalorder %s22, 1
    %s24 = scalar_select %p23, 0, %s22
    %s25 = sadd.s32 1, %s16
    %s26 = scalar_select %p23, %s25, %s16
    %p27 = scmp.ge.s32.totalorder %s26, 2
    %s28 = scalar_select %p27, 0, %s26
    %s29 = ssub.s32 %s16, %s28
    %s30 = ssub.s32 %s17, %s24
    %s31 = sor.u32 %s29, %s30
    %p32 = scmp.eq.s32.totalorder %s31, 0
    %s34 = sadd.s32 %s33, 1
    %s35 = scalar_select %p32, %s33, %s34
    %p38 = pneg %p32
    %p39 = scmp.eq.s32.totalorder %s9, 1
    %p40 = por %p38, %p39
    %p41 = scmp.ne.s32.totalorder %s33, %s36
    %p42 = scmp.eq.s32.totalorder %s9, 0
    %p43 = por %p41, %p42
    %p44 = scmp.ne.s32.totalorder %s33, %s36
    %p45 = scmp.eq.s32.totalorder %s14, 1
    %p46 = por %p44, %p45
    %p47 = scmp.ne.s32.totalorder %s36, %s37
    %p48 = scmp.eq.s32.totalorder %s14, 0
    %p49 = por %p47, %p48
    %p50 = scmp.ne.s32.totalorder %s36, %s37
    %p51 = scmp.eq.s32.totalorder %s15, 1
    %p52 = por %p50, %p51
    %p54 = scmp.ne.s32.totalorder %s37, %s53
    %p55 = scmp.eq.s32.totalorder %s15, 0
    %p56 = por %p54, %p55
    %s58 = sadd.s32 %s57, 1
    %p61 = scmp.eq.s32.totalorder %s9, 1
    %p62 = scmp.ne.s32.totalorder %s57, %s59
    %p63 = scmp.eq.s32.totalorder %s9, 0
    %p64 = por %p62, %p63
    %p65 = scmp.ne.s32.totalorder %s57, %s59
    %p66 = scmp.eq.s32.totalorder %s14, 1
    %p67 = por %p65, %p66
    %p68 = scmp.ne.s32.totalorder %s59, %s60
    %p69 = scmp.eq.s32.totalorder %s14, 0
    %p70 = por %p68, %p69
    %p71 = scmp.ne.s32.totalorder %s59, %s60
    %p72 = scmp.eq.s32.totalorder %s15, 1
    %p73 = por %p71, %p72
    %p75 = scmp.ne.s32.totalorder %s60, %s74
    %p76 = scmp.eq.s32.totalorder %s15, 0
    %p77 = por %p75, %p76
    %s79 = sadd.s32 %s78, 1
    %p82 = scmp.eq.s32.totalorder %s9, 1
    %p83 = scmp.ne.s32.totalorder %s78, %s80
    %p84 = scmp.eq.s32.totalorder %s9, 0
    %p85 = por %p83, %p84
    %p86 = scmp.ne.s32.totalorder %s78, %s80
    %p87 = scmp.eq.s32.totalorder %s14, 1
    %p88 = por %p86, %p87
    %p89 = scmp.ne.s32.totalorder %s80, %s81
    %p90 = scmp.eq.s32.totalorder %s14, 0
    %p91 = por %p89, %p90
    %p92 = scmp.ne.s32.totalorder %s80, %s81
    %p93 = scmp.eq.s32.totalorder %s15, 1
    %p94 = por %p92, %p93
    %p96 = scmp.ne.s32.totalorder %s81, %s95
    %p97 = scmp.eq.s32.totalorder %s15, 0
    %p98 = por %p96, %p97
    %s99 = ssub.s32 %s16, %s28
    %s100 = ssub.s32 %s17, %s24
    %s101 = sor.u32 %s99, %s100
    %p102 = scmp.eq.s32.totalorder %s101, 0
    %s104 = sadd.s32 %s103, 1
    %s105 = scalar_select %p102, %s103, %s104
    %p108 = pneg %p102
    %p109 = scmp.eq.s32.totalorder %s9, 1
    %p110 = por %p108, %p109
    %p111 = scmp.ne.s32.totalorder %s103, %s106
    %p112 = scmp.eq.s32.totalorder %s9, 0
    %p113 = por %p111, %p112
    %p114 = scmp.ne.s32.totalorder %s103, %s106
    %p115 = scmp.eq.s32.totalorder %s14, 1
    %p116 = por %p114, %p115
    %p117 = scmp.ne.s32.totalorder %s106, %s107
    %p118 = scmp.eq.s32.totalorder %s14, 0
    %p119 = por %p117, %p118
    %p120 = scmp.ne.s32.totalorder %s106, %s107
    %p121 = scmp.eq.s32.totalorder %s15, 1
    %p122 = por %p120, %p121
    %p124 = scmp.ne.s32.totalorder %s107, %s123
    %p125 = scmp.eq.s32.totalorder %s15, 0
    %p126 = por %p124, %p125
    %p127 = scmp.le.s32.totalorder 1, %s9
    %p128 = scmp.lt.s32.totalorder %s9, 3
    %p129 = pnand %p127, %p128
    %p130 = pneg %p129
    // Predicated region
    $region9: #{tpu_custom_call.1} parent=5 // pred_check
      _
    $region10: #{tpu_custom_call.1} parent=5 // pred_check_branch
      %132 = sbr.rel (%p129) target = $region12
    $region11: #{tpu_custom_call.1} parent=5 // pred_region
      %s133 = ssub.s32 %s9, 1
      // Predicated region
      $region13: #{tpu_custom_call.1} parent=11 // pred_check
        %p134 = pneg %p70
      $region14: #{tpu_custom_call.1} parent=11 // pred_check_branch
        %136 = sbr.rel (%p134) target = $region16
      $region15: #{tpu_custom_call.1} parent=11 // pred_region
        _
      $region16: #{tpu_custom_call.1} parent=11 // pred_fallthru
        _
      // Predicated region
      $region17: #{tpu_custom_call.1} parent=11 // pred_check
        %p137 = pneg %p91
      $region18: #{tpu_custom_call.1} parent=11 // pred_check_branch
        %139 = sbr.rel (%p137) target = $region20
      $region19: #{tpu_custom_call.1} parent=11 // pred_region
        _
      $region20: #{tpu_custom_call.1} parent=11 // pred_fallthru
        _
    $region12: #{tpu_custom_call.1} parent=5 // pred_fallthru
      _
    %p140 = scmp.lt.s32.totalorder %s9, 2
    // Predicated region
    $region21: #{tpu_custom_call.1} parent=5 // pred_check
      %p141 = pneg %p140
    $region22: #{tpu_custom_call.1} parent=5 // pred_check_branch
      %143 = sbr.rel (%p141) target = $region24
    $region23: #{tpu_custom_call.1} parent=5 // pred_region
      // Predicated region
      $region25: #{tpu_custom_call.1} parent=23 // pred_check
        %p144 = pneg %p43
      $region26: #{tpu_custom_call.1} parent=23 // pred_check_branch
        %146 = sbr.rel (%p144) target = $region28
      $region27: #{tpu_custom_call.1} parent=23 // pred_region
        %s147 = smul.u32 32, %s17
        %p148 = scmp.lt.s32.totalorder %s16, 1
        %s149 = scalar_select %p148, %s16, 1
        %p150 = scmp.lt.s32.totalorder %s147, 31
        %s151 = scalar_select %p150, %s147, 31
        %s152 = smul.addr %s149, 32
        %s153 = sadd.s32 %s151, %s152
        %s154 = smul.addr %s153, 8
        %s155 = scalar_lea.vmem %s0, %s154
        %s156 = smul.u32 32, %s17
      $region28: #{tpu_custom_call.1} parent=23 // pred_fallthru
        _
    $region24: #{tpu_custom_call.1} parent=5 // pred_fallthru
      _
    %p157 = scmp.le.s32.totalorder 1, %s9
    %p158 = scmp.lt.s32.totalorder %s9, 3
    %p159 = pnand %p157, %p158
    %p160 = pneg %p159
    // Predicated region
    $region29: #{tpu_custom_call.1} parent=5 // pred_check
      _
    $region30: #{tpu_custom_call.1} parent=5 // pred_check_branch
      %162 = sbr.rel (%p159) target = $region32
    $region31: #{tpu_custom_call.1} parent=5 // pred_region
      %s163 = ssub.s32 %s9, 1
      %s164 = smul.u32 32, %s19
      %p165 = scmp.lt.s32.totalorder %s18, 1
      %s166 = scalar_select %p165, %s18, 1
      %p167 = scmp.lt.s32.totalorder %s164, 31
      %s168 = scalar_select %p167, %s164, 31
      %s169 = smul.addr %s166, 32
      %s170 = sadd.s32 %s168, %s169
      %s171 = smul.addr %s170, 8
      %s172 = scalar_lea.vmem %s0, %s171
      %p173 = pneg %p49
      %p174 = pneg %p46
      %p175 = pneg %p70
      %p176 = pneg %p67
      %p177 = pneg %p91
      %p178 = pneg %p88
      %p179 = pneg %p119
      %p180 = pneg %p116
      %s181 = smul.u32 16, %s19
      %p182 = scmp.lt.s32.totalorder %s18, 1
      %s183 = scalar_select %p182, %s18, 1
      %p184 = scmp.lt.s32.totalorder %s181, 15
      %s185 = scalar_select %p184, %s181, 15
      %s186 = smul.addr %s185, 4
      %s187 = smul.addr %s183, 64
      %s188 = sadd.s32 %s186, %s187
      %s189 = smul.addr %s188, 8
      %s190 = scalar_lea.vmem %s3, %s189
      %s191 = smul.u32 32, %s19
      %p192 = scmp.lt.s32.totalorder %s18, 1
      %s193 = scalar_select %p192, %s18, 1
      %p194 = scmp.lt.s32.totalorder %s191, 31
      %s195 = scalar_select %p194, %s191, 31
      %s196 = smul.addr %s193, 32
      %s197 = sadd.s32 %s195, %s196
      %s198 = smul.addr %s197, 8
      %s199 = scalar_lea.vmem %s0, %s198
      %s200 = smul.u32 32, %s19
      %s201 = smul.u32 16, %s19
      %p202 = scmp.lt.s32.totalorder %s18, 1
      %s203 = scalar_select %p202, %s18, 1
      %p204 = scmp.lt.s32.totalorder %s201, 15
      %s205 = scalar_select %p204, %s201, 15
      %s206 = smul.addr %s205, 4
      %s207 = smul.addr %s203, 64
      %s208 = sadd.s32 %s206, %s207
      %s209 = smul.addr %s208, 8
      %s210 = scalar_lea.vmem %s3, %s209
      %s211 = smul.u32 16, %s19
      %v212 = vld [vmem:[%s199] sm:$0xff]
      %v213 = vld [vmem:[%s199 + $0x8] sm:$0xff]
      %v214 = vld [vmem:[%s199 + $0x10] sm:$0xff]
      %v215 = vld [vmem:[%s199 + $0x18] sm:$0xff]
      %v216 = vld [vmem:[%s199 + $0x20] sm:$0xff]
      %v217 = vld [vmem:[%s199 + $0x28] sm:$0xff]
      %v218 = vld [vmem:[%s199 + $0x30] sm:$0xff]
      %v219 = vld [vmem:[%s199 + $0x38] sm:$0xff]
      %v220 = vld [vmem:[%s199 + $0x40] sm:$0xff]
      %v221 = vld [vmem:[%s199 + $0x48] sm:$0xff]
      %v222 = vld [vmem:[%s199 + $0x50] sm:$0xff]
      %v223 = vld [vmem:[%s199 + $0x58] sm:$0xff]
      %v224 = vld [vmem:[%s199 + $0x60] sm:$0xff]
      %v225 = vld [vmem:[%s199 + $0x68] sm:$0xff]
      %v226 = vld [vmem:[%s199 + $0x70] sm:$0xff]
      %v227 = vld [vmem:[%s199 + $0x78] sm:$0xff]
      %v228 = vld [vmem:[%s199 + $0x80] sm:$0xff]
      %v229 = vld [vmem:[%s199 + $0x88] sm:$0xff]
      %v230 = vld [vmem:[%s199 + $0x90] sm:$0xff]
      %v231 = vld [vmem:[%s199 + $0x98] sm:$0xff]
      %v232 = vld [vmem:[%s199 + $0xa0] sm:$0xff]
      %v233 = vld [vmem:[%s199 + $0xa8] sm:$0xff]
      %v234 = vld [vmem:[%s199 + $0xb0] sm:$0xff]
      %v235 = vld [vmem:[%s199 + $0xb8] sm:$0xff]
      %v236 = vld [vmem:[%s199 + $0xc0] sm:$0xff]
      %v237 = vld [vmem:[%s199 + $0xc8] sm:$0xff]
      %v238 = vld [vmem:[%s199 + $0xd0] sm:$0xff]
      %v239 = vld [vmem:[%s199 + $0xd8] sm:$0xff]
      %v240 = vld [vmem:[%s199 + $0xe0] sm:$0xff]
      %v241 = vld [vmem:[%s199 + $0xe8] sm:$0xff]
      %v242 = vld [vmem:[%s199 + $0xf0] sm:$0xff]
      %v243 = vld [vmem:[%s199 + $0xf8] sm:$0xff]
      %v244 = vld [vmem:[%s1] sm:$0xf]
      %v245 = vld [vmem:[%s2] sm:$0x1]
      %v247 = vlaneseq
      %v248 = vshrl.u32 %v247, 7
      %v249 = vsub.s32 0, %v248
      %v250 = vrot.slane %v245, %v249
      %vm252 = vcmask 31744
      %v254 = vsel %vm252, %v212, 0
      %v257 = vsel %vm252, %v213, 0
      %v260 = vsel %vm252, %v214, 0
      %v263 = vsel %vm252, %v215, 0
      %v266 = vsel %vm252, %v216, 0
      %v269 = vsel %vm252, %v217, 0
      %v272 = vsel %vm252, %v218, 0
      %v275 = vsel %vm252, %v219, 0
      %v278 = vsel %vm252, %v220, 0
      %v281 = vsel %vm252, %v221, 0
      %v284 = vsel %vm252, %v222, 0
      %v287 = vsel %vm252, %v223, 0
      %v290 = vsel %vm252, %v224, 0
      %v293 = vsel %vm252, %v225, 0
      %v296 = vsel %vm252, %v226, 0
      %v299 = vsel %vm252, %v227, 0
      %v302 = vsel %vm252, %v228, 0
      %v305 = vsel %vm252, %v229, 0
      %v308 = vsel %vm252, %v230, 0
      %v311 = vsel %vm252, %v231, 0
      %v314 = vsel %vm252, %v232, 0
      %v317 = vsel %vm252, %v233, 0
      %v320 = vsel %vm252, %v234, 0
      %v323 = vsel %vm252, %v235, 0
      %v326 = vsel %vm252, %v236, 0
      %v329 = vsel %vm252, %v237, 0
      %v332 = vsel %vm252, %v238, 0
      %v335 = vsel %vm252, %v239, 0
      %v338 = vsel %vm252, %v240, 0
      %v341 = vsel %vm252, %v241, 0
      %v344 = vsel %vm252, %v242, 0
      %v347 = vsel %vm252, %v243, 0
      %vm349 = vcmask 1043456
      %v351 = vsel %vm349, %v244, 0
      %353 = vmatprep.subr.mxu0 0.0
      %354 = vmatpush1.msra.mxu0 %v351
      %355 = vmatprep.subr.mxu0 0.0
      %356 = vmatpush1.msra.mxu0 0.0
      %357 = vmatprep.subr.mxu0 0.0
      %358 = vmatpush1.msra.mxu0 0.0
      %359 = vmatprep.subr.mxu0 0.0
      %360 = vmatpush1.msra.mxu0 0.0
      %361 = vmatprep.subr.mxu0 0.0
      %362 = vmatpush1.msra.mxu0 0.0
      %363 = vmatprep.subr.mxu0 0.0
      %364 = vmatpush1.msra.mxu0 0.0
      %365 = vmatprep.subr.mxu0 0.0
      %366 = vmatpush1.msra.mxu0 0.0
      %367 = vmatprep.subr.mxu0 0.0
      %368 = vmatpush1.msra.mxu0 0.0
      %369 = vmatprep.subr.mxu0 0.0
      %370 = vmatpush1.msra.mxu0 0.0
      %371 = vmatprep.subr.mxu0 0.0
      %372 = vmatpush1.msra.mxu0 0.0
      %373 = vmatprep.subr.mxu0 0.0
      %374 = vmatpush1.msra.mxu0 0.0
      %375 = vmatprep.subr.mxu0 0.0
      %376 = vmatpush1.msra.mxu0 0.0
      %377 = vmatprep.subr.mxu0 0.0
      %378 = vmatpush1.msra.mxu0 0.0
      %379 = vmatprep.subr.mxu0 0.0
      %380 = vmatpush1.msra.mxu0 0.0
      %381 = vmatprep.subr.mxu0 0.0
      %382 = vmatpush1.msra.mxu0 0.0
      %383 = vmatprep.subr.mxu0 0.0
      %384 = vmatpush1.msra.mxu0 0.0
      %385 = vmatprep.subr.mxu0 0.0
      %386 = vmatpush1.msra.mxu0 0.0
      %387 = vmatprep.subr.mxu0 0.0
      %388 = vmatpush1.msra.mxu0 0.0
      %389 = vmatprep.subr.mxu0 0.0
      %390 = vmatpush1.msra.mxu0 0.0
      %391 = vmatprep.subr.mxu0 0.0
      %392 = vmatpush1.msra.mxu0 0.0
      %393 = vmatprep.subr.mxu0 0.0
      %394 = vmatpush1.msra.mxu0 0.0
      %395 = vmatprep.subr.mxu0 0.0
      %396 = vmatpush1.msra.mxu0 0.0
      %397 = vmatprep.subr.mxu0 0.0
      %398 = vmatpush1.msra.mxu0 0.0
      %399 = vmatprep.subr.mxu0 0.0
      %400 = vmatpush1.msra.mxu0 0.0
      %401 = vmatprep.subr.mxu0 0.0
      %402 = vmatpush1.msra.mxu0 0.0
      %403 = vmatprep.subr.mxu0 0.0
      %404 = vmatpush1.msra.mxu0 0.0
      %405 = vmatprep.subr.mxu0 0.0
      %406 = vmatpush1.msra.mxu0 0.0
      %407 = vmatprep.subr.mxu0 0.0
      %408 = vmatpush1.msra.mxu0 0.0
      %409 = vmatprep.subr.mxu0 0.0
      %410 = vmatpush1.msra.mxu0 0.0
      %411 = vmatprep.subr.mxu0 0.0
      %412 = vmatpush1.msra.mxu0 0.0
      %413 = vmatprep.subr.mxu0 0.0
      %414 = vmatpush1.msra.mxu0 0.0
      %415 = vmatprep.subr.mxu0 0.0
      %416 = vmatpush1.msra.mxu0 0.0
      %417 = vmatprep.mubr.f32.mxu0 0.0
      %418 = vmatmul.mubr.f32.gmra.mrb[0].mxu0 %v254
      %v419 = vpop.f32.mrb[0].mxu0
      %v420 = vadd.f32 %v250, %v419
      %v421 = vpop.f32.mrb[0].mxu0
      %422 = vmatprep.mubr.f32.mxu0 0.0
      %423 = vmatmul.mubr.f32.gmra.mrb[0].mxu0 %v257
      %v424 = vpop.f32.mrb[0].mxu0
      %v425 = vadd.f32 %v250, %v424
      %v426 = vpop.f32.mrb[0].mxu0
      %427 = vmatprep.mubr.f32.mxu0 0.0
      %428 = vmatmul.mubr.f32.gmra.mrb[0].mxu0 %v260
      %v429 = vpop.f32.mrb[0].mxu0
      %v430 = vadd.f32 %v250, %v429
      %v431 = vpop.f32.mrb[0].mxu0
      %432 = vmatprep.mubr.f32.mxu0 0.0
      %433 = vmatmul.mubr.f32.gmra.mrb[0].mxu0 %v263
      %v434 = vpop.f32.mrb[0].mxu0
      %v435 = vadd.f32 %v250, %v434
      %v436 = vpop.f32.mrb[0].mxu0
      %437 = vmatprep.mubr.f32.mxu0 0.0
      %438 = vmatmul.mubr.f32.gmra.mrb[0].mxu0 %v266
      %v439 = vpop.f32.mrb[0].mxu0
      %v440 = vadd.f32 %v250, %v439
      %v441 = vpop.f32.mrb[0].mxu0
      %442 = vmatprep.mubr.f32.mxu0 0.0
      %443 = vmatmul.mubr.f32.gmra.mrb[0].mxu0 %v269
      %v444 = vpop.f32.mrb[0].mxu0
      %v445 = vadd.f32 %v250, %v444
      %v446 = vpop.f32.mrb[0].mxu0
      %447 = vmatprep.mubr.f32.mxu0 0.0
      %448 = vmatmul.mubr.f32.gmra.mrb[0].mxu0 %v272
      %v449 = vpop.f32.mrb[0].mxu0
      %v450 = vadd.f32 %v250, %v449
      %v451 = vpop.f32.mrb[0].mxu0
      %452 = vmatprep.mubr.f32.mxu0 0.0
      %453 = vmatmul.mubr.f32.gmra.mrb[0].mxu0 %v275
      %v454 = vpop.f32.mrb[0].mxu0
      %v455 = vadd.f32 %v250, %v454
      %v456 = vpop.f32.mrb[0].mxu0
      %457 = vmatprep.mubr.f32.mxu0 0.0
      %458 = vmatmul.mubr.f32.gmra.mrb[0].mxu0 %v278
      %v459 = vpop.f32.mrb[0].mxu0
      %v460 = vadd.f32 %v250, %v459
      %v461 = vpop.f32.mrb[0].mxu0
      %462 = vmatprep.mubr.f32.mxu0 0.0
      %463 = vmatmul.mubr.f32.gmra.mrb[0].mxu0 %v281
      %v464 = vpop.f32.mrb[0].mxu0
      %v465 = vadd.f32 %v250, %v464
      %v466 = vpop.f32.mrb[0].mxu0
      %467 = vmatprep.mubr.f32.mxu0 0.0
      %468 = vmatmul.mubr.f32.gmra.mrb[0].mxu0 %v284
      %v469 = vpop.f32.mrb[0].mxu0
      %v470 = vadd.f32 %v250, %v469
      %v471 = vpop.f32.mrb[0].mxu0
      %472 = vmatprep.mubr.f32.mxu0 0.0
      %473 = vmatmul.mubr.f32.gmra.mrb[0].mxu0 %v287
      %v474 = vpop.f32.mrb[0].mxu0
      %v475 = vadd.f32 %v250, %v474
      %v476 = vpop.f32.mrb[0].mxu0
      %477 = vmatprep.mubr.f32.mxu0 0.0
      %478 = vmatmul.mubr.f32.gmra.mrb[0].mxu0 %v290
      %v479 = vpop.f32.mrb[0].mxu0
      %v480 = vadd.f32 %v250, %v479
      %v481 = vpop.f32.mrb[0].mxu0
      %482 = vmatprep.mubr.f32.mxu0 0.0
      %483 = vmatmul.mubr.f32.gmra.mrb[0].mxu0 %v293
      %v484 = vpop.f32.mrb[0].mxu0
      %v485 = vadd.f32 %v250, %v484
      %v486 = vpop.f32.mrb[0].mxu0
      %487 = vmatprep.mubr.f32.mxu0 0.0
      %488 = vmatmul.mubr.f32.gmra.mrb[0].mxu0 %v296
      %v489 = vpop.f32.mrb[0].mxu0
      %v490 = vadd.f32 %v250, %v489
      %v491 = vpop.f32.mrb[0].mxu0
      %492 = vmatprep.mubr.f32.mxu0 0.0
      %493 = vmatmul.mubr.f32.gmra.mrb[0].mxu0 %v299
      %v494 = vpop.f32.mrb[0].mxu0
      %v495 = vadd.f32 %v250, %v494
      %v496 = vpop.f32.mrb[0].mxu0
      %497 = vmatprep.mubr.f32.mxu0 0.0
      %498 = vmatmul.mubr.f32.gmra.mrb[0].mxu0 %v302
      %v499 = vpop.f32.mrb[0].mxu0
      %v500 = vadd.f32 %v250, %v499
      %v501 = vpop.f32.mrb[0].mxu0
      %502 = vmatprep.mubr.f32.mxu0 0.0
      %503 = vmatmul.mubr.f32.gmra.mrb[0].mxu0 %v305
      %v504 = vpop.f32.mrb[0].mxu0
      %v505 = vadd.f32 %v250, %v504
      %v506 = vpop.f32.mrb[0].mxu0
      %507 = vmatprep.mubr.f32.mxu0 0.0
      %508 = vmatmul.mubr.f32.gmra.mrb[0].mxu0 %v308
      %v509 = vpop.f32.mrb[0].mxu0
      %v510 = vadd.f32 %v250, %v509
      %v511 = vpop.f32.mrb[0].mxu0
      %512 = vmatprep.mubr.f32.mxu0 0.0
      %513 = vmatmul.mubr.f32.gmra.mrb[0].mxu0 %v311
      %v514 = vpop.f32.mrb[0].mxu0
      %v515 = vadd.f32 %v250, %v514
      %v516 = vpop.f32.mrb[0].mxu0
      %517 = vmatprep.mubr.f32.mxu0 0.0
      %518 = vmatmul.mubr.f32.gmra.mrb[0].mxu0 %v314
      %v519 = vpop.f32.mrb[0].mxu0
      %v520 = vadd.f32 %v250, %v519
      %v521 = vpop.f32.mrb[0].mxu0
      %522 = vmatprep.mubr.f32.mxu0 0.0
      %523 = vmatmul.mubr.f32.gmra.mrb[0].mxu0 %v317
      %v524 = vpop.f32.mrb[0].mxu0
      %v525 = vadd.f32 %v250, %v524
      %v526 = vpop.f32.mrb[0].mxu0
      %527 = vmatprep.mubr.f32.mxu0 0.0
      %528 = vmatmul.mubr.f32.gmra.mrb[0].mxu0 %v320
      %v529 = vpop.f32.mrb[0].mxu0
      %v530 = vadd.f32 %v250, %v529
      %v531 = vpop.f32.mrb[0].mxu0
      %532 = vmatprep.mubr.f32.mxu0 0.0
      %533 = vmatmul.mubr.f32.gmra.mrb[0].mxu0 %v323
      %v534 = vpop.f32.mrb[0].mxu0
      %v535 = vadd.f32 %v250, %v534
      %v536 = vpop.f32.mrb[0].mxu0
      %537 = vmatprep.mubr.f32.mxu0 0.0
      %538 = vmatmul.mubr.f32.gmra.mrb[0].mxu0 %v326
      %v539 = vpop.f32.mrb[0].mxu0
      %v540 = vadd.f32 %v250, %v539
      %v541 = vpop.f32.mrb[0].mxu0
      %542 = vmatprep.mubr.f32.mxu0 0.0
      %543 = vmatmul.mubr.f32.gmra.mrb[0].mxu0 %v329
      %v544 = vpop.f32.mrb[0].mxu0
      %v545 = vadd.f32 %v250, %v544
      %v546 = vpop.f32.mrb[0].mxu0
      %547 = vmatprep.mubr.f32.mxu0 0.0
      %548 = vmatmul.mubr.f32.gmra.mrb[0].mxu0 %v332
      %v549 = vpop.f32.mrb[0].mxu0
      %v550 = vadd.f32 %v250, %v549
      %v551 = vpop.f32.mrb[0].mxu0
      %552 = vmatprep.mubr.f32.mxu0 0.0
      %553 = vmatmul.mubr.f32.gmra.mrb[0].mxu0 %v335
      %v554 = vpop.f32.mrb[0].mxu0
      %v555 = vadd.f32 %v250, %v554
      %v556 = vpop.f32.mrb[0].mxu0
      %557 = vmatprep.mubr.f32.mxu0 0.0
      %558 = vmatmul.mubr.f32.gmra.mrb[0].mxu0 %v338
      %v559 = vpop.f32.mrb[0].mxu0
      %v560 = vadd.f32 %v250, %v559
      %v561 = vpop.f32.mrb[0].mxu0
      %562 = vmatprep.mubr.f32.mxu0 0.0
      %563 = vmatmul.mubr.f32.gmra.mrb[0].mxu0 %v341
      %v564 = vpop.f32.mrb[0].mxu0
      %v565 = vadd.f32 %v250, %v564
      %v566 = vpop.f32.mrb[0].mxu0
      %567 = vmatprep.mubr.f32.mxu0 0.0
      %568 = vmatmul.mubr.f32.gmra.mrb[0].mxu0 %v344
      %v569 = vpop.f32.mrb[0].mxu0
      %v570 = vadd.f32 %v250, %v569
      %v571 = vpop.f32.mrb[0].mxu0
      %572 = vmatprep.mubr.f32.mxu0 0.0
      %573 = vmatmul.mubr.f32.gmra.mrb[0].mxu0 %v347
      %v574 = vpop.f32.mrb[0].mxu0
      %v575 = vadd.f32 %v250, %v574
      %v576 = vpop.f32.mrb[0].mxu0
      %577 = vdwg.mxu0
      %578 = vst.msk [vmem:[%s210] sm:$0xff] %vm252, %v420
      %579 = vst.msk [vmem:[%s210 + $0x8] sm:$0xff] %vm252, %v425
      %580 = vst.msk [vmem:[%s210 + $0x20] sm:$0xff] %vm252, %v430
      %581 = vst.msk [vmem:[%s210 + $0x28] sm:$0xff] %vm252, %v435
      %582 = vst.msk [vmem:[%s210 + $0x40] sm:$0xff] %vm252, %v440
      %583 = vst.msk [vmem:[%s210 + $0x48] sm:$0xff] %vm252, %v445
      %584 = vst.msk [vmem:[%s210 + $0x60] sm:$0xff] %vm252, %v450
      %585 = vst.msk [vmem:[%s210 + $0x68] sm:$0xff] %vm252, %v455
      %586 = vst.msk [vmem:[%s210 + $0x80] sm:$0xff] %vm252, %v460
      %587 = vst.msk [vmem:[%s210 + $0x88] sm:$0xff] %vm252, %v465
      %588 = vst.msk [vmem:[%s210 + $0xa0] sm:$0xff] %vm252, %v470
      %589 = vst.msk [vmem:[%s210 + $0xa8] sm:$0xff] %vm252, %v475
      %590 = vst.msk [vmem:[%s210 + $0xc0] sm:$0xff] %vm252, %v480
      %591 = vst.msk [vmem:[%s210 + $0xc8] sm:$0xff] %vm252, %v485
      %592 = vst.msk [vmem:[%s210 + $0xe0] sm:$0xff] %vm252, %v490
      %593 = vst.msk [vmem:[%s210 + $0xe8] sm:$0xff] %vm252, %v495
      %594 = vst.msk [vmem:[%s210 + $0x100] sm:$0xff] %vm252, %v500
      %595 = vst.msk [vmem:[%s210 + $0x108] sm:$0xff] %vm252, %v505
      %596 = vst.msk [vmem:[%s210 + $0x120] sm:$0xff] %vm252, %v510
      %597 = vst.msk [vmem:[%s210 + $0x128] sm:$0xff] %vm252, %v515
      %598 = vst.msk [vmem:[%s210 + $0x140] sm:$0xff] %vm252, %v520
      %599 = vst.msk [vmem:[%s210 + $0x148] sm:$0xff] %vm252, %v525
      %600 = vst.msk [vmem:[%s210 + $0x160] sm:$0xff] %vm252, %v530
      %601 = vst.msk [vmem:[%s210 + $0x168] sm:$0xff] %vm252, %v535
      %602 = vst.msk [vmem:[%s210 + $0x180] sm:$0xff] %vm252, %v540
      %603 = vst.msk [vmem:[%s210 + $0x188] sm:$0xff] %vm252, %v545
      %604 = vst.msk [vmem:[%s210 + $0x1a0] sm:$0xff] %vm252, %v550
      %605 = vst.msk [vmem:[%s210 + $0x1a8] sm:$0xff] %vm252, %v555
      %606 = vst.msk [vmem:[%s210 + $0x1c0] sm:$0xff] %vm252, %v560
      %607 = vst.msk [vmem:[%s210 + $0x1c8] sm:$0xff] %vm252, %v565
      %608 = vst.msk [vmem:[%s210 + $0x1e0] sm:$0xff] %vm252, %v570
      %609 = vst.msk [vmem:[%s210 + $0x1e8] sm:$0xff] %vm252, %v575
      %s610 = scalar_lea.vmem %s210, 16
      %611 = vst.msk [vmem:[%s610] sm:$0xff] %vm252, %v420
      %612 = vst.msk [vmem:[%s610 + $0x8] sm:$0xff] %vm252, %v425
      %613 = vst.msk [vmem:[%s610 + $0x20] sm:$0xff] %vm252, %v430
      %614 = vst.msk [vmem:[%s610 + $0x28] sm:$0xff] %vm252, %v435
      %615 = vst.msk [vmem:[%s610 + $0x40] sm:$0xff] %vm252, %v440
      %616 = vst.msk [vmem:[%s610 + $0x48] sm:$0xff] %vm252, %v445
      %617 = vst.msk [vmem:[%s610 + $0x60] sm:$0xff] %vm252, %v450
      %618 = vst.msk [vmem:[%s610 + $0x68] sm:$0xff] %vm252, %v455
      %619 = vst.msk [vmem:[%s610 + $0x80] sm:$0xff] %vm252, %v460
      %620 = vst.msk [vmem:[%s610 + $0x88] sm:$0xff] %vm252, %v465
      %621 = vst.msk [vmem:[%s610 + $0xa0] sm:$0xff] %vm252, %v470
      %622 = vst.msk [vmem:[%s610 + $0xa8] sm:$0xff] %vm252, %v475
      %623 = vst.msk [vmem:[%s610 + $0xc0] sm:$0xff] %vm252, %v480
      %624 = vst.msk [vmem:[%s610 + $0xc8] sm:$0xff] %vm252, %v485
      %625 = vst.msk [vmem:[%s610 + $0xe0] sm:$0xff] %vm252, %v490
      %626 = vst.msk [vmem:[%s610 + $0xe8] sm:$0xff] %vm252, %v495
      %627 = vst.msk [vmem:[%s610 + $0x100] sm:$0xff] %vm252, %v500
      %628 = vst.msk [vmem:[%s610 + $0x108] sm:$0xff] %vm252, %v505
      %629 = vst.msk [vmem:[%s610 + $0x120] sm:$0xff] %vm252, %v510
      %630 = vst.msk [vmem:[%s610 + $0x128] sm:$0xff] %vm252, %v515
      %631 = vst.msk [vmem:[%s610 + $0x140] sm:$0xff] %vm252, %v520
      %632 = vst.msk [vmem:[%s610 + $0x148] sm:$0xff] %vm252, %v525
      %633 = vst.msk [vmem:[%s610 + $0x160] sm:$0xff] %vm252, %v530
      %634 = vst.msk [vmem:[%s610 + $0x168] sm:$0xff] %vm252, %v535
      %635 = vst.msk [vmem:[%s610 + $0x180] sm:$0xff] %vm252, %v540
      %636 = vst.msk [vmem:[%s610 + $0x188] sm:$0xff] %vm252, %v545
      %637 = vst.msk [vmem:[%s610 + $0x1a0] sm:$0xff] %vm252, %v550
      %638 = vst.msk [vmem:[%s610 + $0x1a8] sm:$0xff] %vm252, %v555
      %639 = vst.msk [vmem:[%s610 + $0x1c0] sm:$0xff] %vm252, %v560
      %640 = vst.msk [vmem:[%s610 + $0x1c8] sm:$0xff] %vm252, %v565
      %641 = vst.msk [vmem:[%s610 + $0x1e0] sm:$0xff] %vm252, %v570
      %642 = vst.msk [vmem:[%s610 + $0x1e8] sm:$0xff] %vm252, %v575
      %s643 = smul.u32 16, %s19
      %p644 = scmp.lt.s32.totalorder %s18, 1
      %s645 = scalar_select %p644, %s18, 1
      %p646 = scmp.lt.s32.totalorder %s643, 15
      %s647 = scalar_select %p646, %s643, 15
      %s648 = smul.addr %s647, 4
      %s649 = smul.addr %s645, 64
      %s650 = sadd.s32 %s648, %s649
      %s651 = smul.addr %s650, 8
      %s652 = scalar_lea.vmem %s3, %s651
      // Predicated region
      $region33: #{tpu_custom_call.1} parent=31 // pred_check
        %p653 = pneg %p116
      $region34: #{tpu_custom_call.1} parent=31 // pred_check_branch
        %655 = sbr.rel (%p653) target = $region36
      $region35: #{tpu_custom_call.1} parent=31 // pred_region
        %s656 = smul.u32 16, %s19
      $region36: #{tpu_custom_call.1} parent=31 // pred_fallthru
        _
    $region32: #{tpu_custom_call.1} parent=5 // pred_fallthru
      _
    %p657 = scmp.le.s32.totalorder 2, %s9
    // Predicated region
    $region37: #{tpu_custom_call.1} parent=5 // pred_check
      %p658 = pneg %p657
    $region38: #{tpu_custom_call.1} parent=5 // pred_check_branch
      %660 = sbr.rel (%p658) target = $region40
    $region39: #{tpu_custom_call.1} parent=5 // pred_region
      %s661 = ssub.s32 %s9, 2
      // Predicated region
      $region41: #{tpu_custom_call.1} parent=39 // pred_check
        %p662 = pneg %p122
      $region42: #{tpu_custom_call.1} parent=39 // pred_check_branch
        %664 = sbr.rel (%p662) target = $region44
      $region43: #{tpu_custom_call.1} parent=39 // pred_region
        %s665 = smul.u32 16, %s21
        %p666 = scmp.lt.s32.totalorder %s20, 1
        %s667 = scalar_select %p666, %s20, 1
        %p668 = scmp.lt.s32.totalorder %s665, 15
        %s669 = scalar_select %p668, %s665, 15
        %s670 = smul.addr %s669, 4
        %s671 = smul.addr %s667, 64
        %s672 = sadd.s32 %s670, %s671
        %s673 = smul.addr %s672, 8
        %s674 = scalar_lea.vmem %s3, %s673
      $region44: #{tpu_custom_call.1} parent=39 // pred_fallthru
        _
    $region40: #{tpu_custom_call.1} parent=5 // pred_fallthru
      _
  $region6: #{tpu_custom_call.1} parent=0 // loop_footer
    %s13 = sadd.s32 1, %s9
  $region7: #{tpu_custom_call.1} parent=0 // loop_footer_branch
    %8 = sbr.rel target = $region3
  $region8: #{tpu_custom_call.1} parent=0 // loop_exit
    _

</llo_original>
